<compile_context>
chip_gen: v7x
topology: tpu7x:2x2x1
jax: 0.10.0
libtpu: 0.0.40
codegen_flags: <defaults>
</compile_context>

<pallas_src>
import functools

import jax
import jax.numpy as jnp
from jax.experimental import pallas as pl
from jax.experimental.pallas import tpu as pltpu

NEG_INF_A = -4.0  # self.A in the PyTorch module


def _rce_kernel(x_ref, xt_ref, o_ref, *, n_valid, tile_n, low_precision_exp):
    # x_ref:  (TN, C) logits, native dtype.
    # xt_ref: (TN, 1) target-column logit, native dtype (gathered in wrapper).
    # o_ref:  (8, 128) f32 per-tile partial-sum block.
    i = pl.program_id(0)

    x = x_ref[...]                                         # (TN, C) native dtype
    tn = x.shape[0]

    if low_precision_exp and x.dtype == jnp.bfloat16:
        # v7x-class path: bf16 exp keeps the single EUP off the critical slot;
        # the reduction and everything (TN, 1)-shaped stays in f32.
        m = jnp.max(x, axis=1, keepdims=True)              # (TN, 1) bf16 (exact)
        e = jnp.exp(x - m)                                 # (TN, C) bf16 exp
        denom = jnp.sum(e.astype(jnp.float32), axis=1, keepdims=True)
        m32 = m.astype(jnp.float32)
    else:
        x32 = x.astype(jnp.float32)
        m32 = jnp.max(x32, axis=1, keepdims=True)          # (TN, 1)
        e = jnp.exp(x32 - m32)                             # (TN, C) f32
        denom = jnp.sum(e, axis=1, keepdims=True)          # (TN, 1)

    # Target softmax probability: only (TN, 1) work, full f32 precision.
    xt = xt_ref[...].astype(jnp.float32)                   # (TN, 1)
    gt = jnp.exp(xt - m32) / denom                         # (TN, 1)

    # sum_c softmax == 1 by construction, so per-row term is (-A)*gt + A.
    per_row = (-NEG_INF_A) * gt + NEG_INF_A                # (TN, 1)

    # Discard ragged-last-block / padded rows (mask stays AFTER the division
    # so undefined tail data — even NaN/Inf — is dropped by the select).
    row = i * tile_n + jax.lax.broadcasted_iota(jnp.int32, (tn, 1), 0)
    per_row = jnp.where(row < n_valid, per_row, 0.0)

    partial = jnp.sum(per_row, axis=0, keepdims=True)      # (1, 1)
    o_ref[...] = jnp.broadcast_to(partial, o_ref.shape)


def reverse_cross_entropy(logits, target, *, tile_n=None, low_precision_exp=None):
    """logits: (N, C) float (any dtype); target: (N,) int. Returns f32 scalar."""
    n, c = logits.shape
    itemsize = jnp.dtype(logits.dtype).itemsize

    # Gather the target-column logit per row in plain JAX (N elements; no
    # second pass over the (N, C) array and no in-kernel iota/compare/select).
    idx = target.reshape(n, 1).astype(jnp.int32)
    x_t = jnp.take_along_axis(logits, idx, axis=1)          # (N, 1), native dtype

    # Hardware query: VMEM capacity drives both tile sizing and the bf16-exp
    # default (64 MiB => v7x-class part).
    vmem_cap = None
    try:
        vmem_cap = int(pltpu.get_tpu_info().vmem_capacity_bytes)
    except Exception:
        pass
    if low_precision_exp is None:
        low_precision_exp = (
            logits.dtype == jnp.bfloat16
            and vmem_cap is not None
            and vmem_cap <= 96 * 1024 * 1024
        )
    if vmem_cap is None:
        vmem_cap = 64 * 1024 * 1024                         # conservative fallback

    # Real per-row VMEM footprint: 2 double-buffered native-dtype input rows
    # plus ~3 tile-sized f32 intermediates (cast / x-m / exp) and small (TN,1)
    # extras.  Keep the total under ~half of physical VMEM; tell Mosaic the
    # actual limit we are designing for.
    per_row_bytes = c * (2 * itemsize + 3 * 4) + 256
    budget = vmem_cap // 2
    vmem_limit = min(int(vmem_cap * 3 // 4), vmem_cap - 4 * 1024 * 1024)

    n_pad8 = ((n + 7) // 8) * 8
    if tile_n is None:
        tn = budget // per_row_bytes
        tn = max(8, (min(tn, 65536) // 8) * 8)
        tn = min(tn, n_pad8)
        # Prefer >= 2 grid steps so the parallel batch axis can shard across
        # both TensorCores on v7x-class chips.
        if n_pad8 >= 16 and tn >= n_pad8:
            tn = max(8, ((n_pad8 // 2 + 7) // 8) * 8)
    else:
        tn = max(8, (tile_n // 8) * 8)
        tn = min(tn, n_pad8)

    num_tiles = pl.cdiv(n, tn)  # ragged last block; NO jnp.pad of the logits

    kernel = functools.partial(
        _rce_kernel, n_valid=n, tile_n=tn, low_precision_exp=low_precision_exp
    )

    partial_slab = pl.pallas_call(
        kernel,
        out_shape=jax.ShapeDtypeStruct((num_tiles * 8, 128), jnp.float32),
        grid=(num_tiles,),
        in_specs=[
            pl.BlockSpec((tn, c), lambda i: (i, 0)),
            pl.BlockSpec((tn, 1), lambda i: (i, 0)),
        ],
        out_specs=pl.BlockSpec((8, 128), lambda i: (i, 0)),
        compiler_params=pltpu.CompilerParams(
            dimension_semantics=("parallel",),
            vmem_limit_bytes=vmem_limit,
        ),
    )(logits, x_t)

    # Tiny cross-tile reduction + mean in plain JAX.
    partials = partial_slab.reshape(num_tiles, 8, 128)[:, 0, 0]
    return jnp.sum(partials) / jnp.float32(n)


def _reference(logits, target):
    """Literal JAX translation of the PyTorch module's forward."""
    p = jax.nn.softmax(logits.astype(jnp.float32), axis=1)
    gt = jnp.take_along_axis(p, target.reshape(-1, 1).astype(jnp.int32), axis=1)
    n, c = p.shape
    log_target = jnp.concatenate(
        [jnp.full((n, 1), -NEG_INF_A, jnp.float32),
         jnp.full((n, c), NEG_INF_A, jnp.float32)], axis=1)
    _input = jnp.concatenate([gt, p], axis=1)
    return jnp.sum(_input * log_target) / n


if __name__ == "__main__":
    key = jax.random.PRNGKey(0)
    k1, k2, k3, k4 = jax.random.split(key, 4)

    # Case 1: small f32 problem, single tile, full-precision path.
    N1, C1 = 8, 32
    logits1 = jax.random.normal(k1, (N1, C1), dtype=jnp.float32)
    target1 = jax.random.randint(k2, (N1,), 0, C1, dtype=jnp.int32)
    out1 = reverse_cross_entropy(logits1, target1)
    jax.block_until_ready(out1)
    ref1 = _reference(logits1, target1)
    assert jnp.allclose(out1, ref1, atol=1e-5, rtol=1e-5), (out1, ref1)

    # Case 2: bf16 logits, explicit small tiles -> 3 grid steps with a ragged
    # last block (no wrapper pad); full-precision exp path.
    N2, C2 = 20, 32
    logits2 = jax.random.normal(k3, (N2, C2), dtype=jnp.bfloat16)
    target2 = jax.random.randint(k4, (N2,), 0, C2, dtype=jnp.int32)
    out2 = reverse_cross_entropy(logits2, target2, tile_n=8,
                                 low_precision_exp=False)
    jax.block_until_ready(out2)
    ref2 = _reference(logits2, target2)
    assert jnp.allclose(out2, ref2, atol=1e-4, rtol=1e-4), (out2, ref2)

    # Case 3: same bf16 problem, auto tile sizing (>=2 tiles, ragged last
    # block) with the low-precision (bf16) exp path explicitly enabled.
    out3 = reverse_cross_entropy(logits2, target2, low_precision_exp=True)
    jax.block_until_ready(out3)
    assert jnp.allclose(out3, ref2, atol=2e-3, rtol=2e-3), (out3, ref2)

    print("KERNEL_OK")
</pallas_src>

<mosaic_0001>
module attributes {stable_mosaic.version = 11 : i64} {
  func.func @_rce_kernel(%arg0: i32, %arg1: memref<8x32xf32, #tpu.memory_space<vmem>>, %arg2: memref<8x1xf32, #tpu.memory_space<vmem>>, %arg3: memref<8x128xf32, #tpu.memory_space<vmem>>) attributes {dimension_semantics = [#tpu.dimension_semantics<parallel>], iteration_bounds = array<i64: 1>, scalar_prefetch = 0 : i64, scratch_operands = 0 : i64, tpu.core_type = #tpu.core_type<tc>, window_params = [{transform_indices = @transform_0, window_bounds = array<i64: 8, 32>}, {transform_indices = @transform_1, window_bounds = array<i64: 8, 1>}, {transform_indices = @transform_2, window_bounds = array<i64: 8, 128>}]} {
    %c0 = arith.constant 0 : index
    %c0_0 = arith.constant 0 : index
    %0 = vector.load %arg1[%c0, %c0_0] : memref<8x32xf32, #tpu.memory_space<vmem>>, vector<8x32xf32>
    %cst = arith.constant dense<0xFF800000> : vector<8xf32>
    %1 = vector.multi_reduction <maximumf>, %0, %cst [1] : vector<8x32xf32> to vector<8xf32>
    %2 = vector.shape_cast %1 : vector<8xf32> to vector<8x1xf32>
    %3 = vector.broadcast %2 : vector<8x1xf32> to vector<8x32xf32>
    %4 = arith.subf %0, %3 : vector<8x32xf32>
    %5 = math.exp %4 : vector<8x32xf32>
    %cst_1 = arith.constant dense<0.000000e+00> : vector<8xf32>
    %6 = vector.multi_reduction <add>, %5, %cst_1 [1] : vector<8x32xf32> to vector<8xf32>
    %7 = vector.shape_cast %6 : vector<8xf32> to vector<8x1xf32>
    %c0_2 = arith.constant 0 : index
    %c0_3 = arith.constant 0 : index
    %8 = vector.load %arg2[%c0_2, %c0_3] : memref<8x1xf32, #tpu.memory_space<vmem>>, vector<8x1xf32>
    %9 = arith.subf %8, %2 : vector<8x1xf32>
    %10 = math.exp %9 : vector<8x1xf32>
    %11 = arith.divf %10, %7 : vector<8x1xf32>
    %cst_4 = arith.constant 4.000000e+00 : f32
    %12 = vector.broadcast %cst_4 : f32 to vector<8x1xf32>
    %13 = arith.mulf %12, %11 : vector<8x1xf32>
    %cst_5 = arith.constant -4.000000e+00 : f32
    %14 = vector.broadcast %cst_5 : f32 to vector<8x1xf32>
    %15 = arith.addf %13, %14 : vector<8x1xf32>
    %c8_i32 = arith.constant 8 : i32
    %16 = arith.muli %arg0, %c8_i32 : i32
    %17 = tpu.iota {dimensions = array<i32: 0>} : vector<8x1xi32>
    %18 = vector.broadcast %16 : i32 to vector<8x1xi32>
    %19 = arith.addi %18, %17 : vector<8x1xi32>
    %c8_i32_6 = arith.constant 8 : i32
    %20 = vector.broadcast %c8_i32_6 : i32 to vector<8x1xi32>
    %21 = arith.cmpi slt, %19, %20 : vector<8x1xi32>
    %cst_7 = arith.constant 0.000000e+00 : f32
    %22 = vector.broadcast %cst_7 : f32 to vector<8x1xf32>
    %23 = arith.select %21, %15, %22 : vector<8x1xi1>, vector<8x1xf32>
    %cst_8 = arith.constant dense<0.000000e+00> : vector<1xf32>
    %24 = vector.multi_reduction <add>, %23, %cst_8 [0] : vector<8x1xf32> to vector<1xf32>
    %25 = vector.shape_cast %24 : vector<1xf32> to vector<1x1xf32>
    %26 = vector.shape_cast %25 : vector<1x1xf32> to vector<1x1xf32>
    %27 = vector.broadcast %26 : vector<1x1xf32> to vector<8x128xf32>
    %c0_9 = arith.constant 0 : index
    %c0_10 = arith.constant 0 : index
    %28 = vector.load %arg3[%c0_9, %c0_10] : memref<8x128xf32, #tpu.memory_space<vmem>>, vector<8x128xf32>
    tpu.vector_store %arg3[%c0_9, %c0_10], %27 {strides = array<i32>} : memref<8x128xf32, #tpu.memory_space<vmem>>, vector<8x128xf32>,
    return
  }
  func.func @transform_0(%arg0: i32) -> (i32, i32) {
    %c0_i32 = arith.constant 0 : i32
    %c0_i32_0 = arith.constant 0 : i32
    return %arg0, %c0_i32 : i32, i32
  }
  func.func @transform_1(%arg0: i32) -> (i32, i32) {
    %c0_i32 = arith.constant 0 : i32
    %c0_i32_0 = arith.constant 0 : i32
    return %arg0, %c0_i32 : i32, i32
  }
  func.func @transform_2(%arg0: i32) -> (i32, i32) {
    %c0_i32 = arith.constant 0 : i32
    %c0_i32_0 = arith.constant 0 : i32
    return %arg0, %c0_i32 : i32, i32
  }
}

</mosaic_0001>

<llo_original>
// kernel: tpu_custom_call.1
$region0: #{tpu_custom_call.1}
  #allocation0 [shape = 'u32[]', space=smem, size = 0x4, offset = 0x4, fixed_abs, tag = 'smem constant byte address 0x4 - core index']
  #allocation1 [shape = 'u32[144,128]{1,0:T(1,128)}', space=vmem, size = 0x12000, scoped, tag = 'internal scratch']
  %s0 = inlined_call_operand.vmem [shape: f32[8,32], index: 0, kind: input, shape index: {}]
  %s1 = inlined_call_operand.vmem [shape: f32[8,1], index: 1, kind: input, shape index: {}]
  %s2 = inlined_call_operand.hbm [shape: f32[8,128], index: 2, kind: output, shape index: {}]
  %s3 = sld [smem:[#allocation0]]
  $region18: #{tpu_custom_call.1} parent=0
    _
  %s5 = ssub.s32 1, %s3
  %s6 = scalar_select 0, %s5, %s3
  $region1: #{tpu_custom_call.1} parent=0
    #allocation2 [shape = 'u8[4096]{0}', space=vmem, size = 0x1000, scoped, tag = 'output window, operand 0, single buffered']
    #allocation3 [shape = 's32[1]{0}', space=sflag, size = 0x4, scoped, tag = 'scoped memory for tpu_custom_call.1']
    %7 = vsyncpa [#allocation3], 0
    // Predicated region
    $region2: #{tpu_custom_call.1} parent=1 // pred_check
      _
    $region3: #{tpu_custom_call.1} parent=1 // pred_check_branch
      %9 = sbr.rel (0) target = $region5
    $region4: #{tpu_custom_call.1} parent=1 // pred_region
      _
    $region5: #{tpu_custom_call.1} parent=1 // pred_fallthru
      _
    // Predicated region
    $region6: #{tpu_custom_call.1} parent=1 // pred_check
      _
    $region7: #{tpu_custom_call.1} parent=1 // pred_check_branch
      %11 = sbr.rel (0) target = $region9
    $region8: #{tpu_custom_call.1} parent=1 // pred_region
      _
    $region9: #{tpu_custom_call.1} parent=1 // pred_fallthru
      _
    %v12 = vld [vmem:[%s0] sm:$0xff]
    %vm13 = vcmask 261120
    %v14 = vsel %vm13, %v12, -inf
    %15 = vmax.xlane.f32.xlu0 %v14
    %v16 = vpop.xlane.xlu0 %15
    %v17 = vsub.f32 %v12, %v16
    %v18 = vmul.f32 %v17, 1.442695
    %v19 = vpow.pop %v18
    %v20 = vsel %vm13, %v19, 0.0
    %21 = vadd.xlane.f32.xlu0 %v20
    %v22 = vpop.xlane.xlu0 %21
    %v23 = vld [vmem:[%s1] sm:$0xff]
    %v24 = vsub.f32 %v23, %v16
    %v25 = vmul.f32 %v24, 1.442695
    %v26 = vpow.pop %v25
    %v27 = vrcp.pop %v22
    %v28 = vmul.f32 %v26, %v27
    %v29 = vmul.f32 %v28, 4.0
    %v30 = vadd.f32 %v29, -4.0
    %s31 = smul.u32 0, 8
    %v32 = vlaneseq
    %v33 = vshrl.u32 %v32, 7
    %v34 = vstv %s31
    %v35 = vadd.s32 %v34, %v33
    %vm36 = vcmp.lt.s32.totalorder %v35, 8
    %v37 = vsel %vm36, %v30, 0.0
    %vm38 = vcmask 7168
    %v39 = vsel %vm38, %v37, 0.0
    %v40 = vrot.slane %v39, 4
    %v41 = vadd.f32 %v39, %v40
    %v42 = vrot.slane %v41, 2
    %v43 = vadd.f32 %v41, %v42
    %v44 = vrot.slane %v43, 1
    %v45 = vadd.f32 %v43, %v44
    %47 = vset.pattern.permute.xlu0 0
    %48 = vperm.xlu0 %47, %v45
    %v49 = vpop.permute.xlu0 %48
    %51 = vst [vmem:[#allocation2] sm:$0xff] %v49
    // Predicated region
    $region10: #{tpu_custom_call.1} parent=1 // pred_check
      _
    $region11: #{tpu_custom_call.1} parent=1 // pred_check_branch
      %53 = sbr.rel (0) target = $region13
    $region12: #{tpu_custom_call.1} parent=1 // pred_region
      %s55 = ssub.s32 128, 128
      %56 = vsyncadd [#allocation3], %s55
      %s58 = sshll.u32 [#allocation2], 4
      %s59 = int_to_ptr.vmem [resolvable:$true] %s58
      %61 = dma.vmem_to_hbm [thread:$0]  %s59, 128, %s2, [#allocation3]
    $region13: #{tpu_custom_call.1} parent=1 // pred_fallthru
      _
    // Predicated region
    $region14: #{tpu_custom_call.1} parent=1 // pred_check
      _
    $region15: #{tpu_custom_call.1} parent=1 // pred_check_branch
      %63 = sbr.rel (0) target = $region17
    $region16: #{tpu_custom_call.1} parent=1 // pred_region
      %64 = dma.done [#allocation3], 128
    $region17: #{tpu_custom_call.1} parent=1 // pred_fallthru
      _
    %65 = vsyncpa [#allocation3], 1

</llo_original>
